<compile_context>
chip_gen: v7x
topology: tpu7x:2x2x1
jax: 0.10.0
libtpu: 0.0.40
codegen_flags: <defaults>
</compile_context>

<pallas_src>
import jax
import jax.numpy as jnp
from jax.experimental import pallas as pl
from jax.experimental.pallas import tpu as pltpu

_LANES = 128


def _hswish_kernel(x_ref, o_ref):
    x = x_ref[...].astype(jnp.float32)
    # relu6(x + 3) = clamp(x + 3, 0, 6); all on the VPU.
    r6 = jnp.minimum(jnp.maximum(x + 3.0, 0.0), 6.0)
    o_ref[...] = (x * r6 / 6.0).astype(o_ref.dtype)


def _hswish_jnp(x):
    xf = x.astype(jnp.float32)
    return (xf * jnp.clip(xf + 3.0, 0.0, 6.0) / 6.0).astype(x.dtype)


def _vmem_capacity_bytes() -> int:
    """Per-core VMEM capacity; conservative 64 MiB fallback (v7x per-TC)."""
    try:
        cap = int(pltpu.get_tpu_info().vmem_capacity_bytes)
        if cap > 0:
            return cap
    except Exception:
        pass
    return 64 * 1024 * 1024


def _num_tensorcores() -> int:
    """Number of TensorCores per chip (2 on v7x, 1 on v5e/v6e). Defaults to 1."""
    try:
        info = pltpu.get_tpu_info()
        for attr in ("num_cores", "tensor_cores_per_chip", "num_tensorcores",
                     "cores_per_chip"):
            n = getattr(info, attr, None)
            if isinstance(n, int) and n > 0:
                return n
    except Exception:
        pass
    try:
        kind = jax.devices()[0].device_kind.lower()
        if "v7" in kind:
            return 2
    except Exception:
        pass
    return 1


def _round_up(n: int, m: int) -> int:
    return ((n + m - 1) // m) * m


def hswish(x: jax.Array, *, target_tile_bytes: int = 4 * 1024 * 1024) -> jax.Array:
    """Elementwise hard-swish, exact match of x * relu6(x + 3) / 6."""
    orig_shape = x.shape
    orig_dtype = x.dtype
    total = x.size
    if total == 0:
        return x

    dtype_size = jnp.dtype(orig_dtype).itemsize
    # Packed-sublane granularity per dtype width (8 for 32-bit, 16 for 16-bit,
    # 32 for 8-bit).
    sublane_mult = {1: 32, 2: 16}.get(dtype_size, 8)

    x_flat = x.reshape(-1)
    rows = total // _LANES
    tail = total - rows * _LANES

    if rows == 0:
        # Fewer than 128 elements: a kernel launch isn't worth it.
        return _hswish_jnp(x_flat).reshape(orig_shape)

    # Aligned common case: the reshape is a free (contiguous) view, no extra
    # HBM traffic.  Ragged case: kernel covers the prefix, jnp handles the
    # (<128 element) tail.
    if tail == 0:
        x2d = x_flat.reshape(rows, _LANES)
    else:
        x2d = x_flat[: rows * _LANES].reshape(rows, _LANES)

    # --- tile selection ------------------------------------------------------
    vmem_cap = _vmem_capacity_bytes()
    num_cores = _num_tensorcores()

    # in + out, double-buffered => ~4x tile bytes resident; keep that inside
    # ~half of VMEM (and never beyond 48 MiB of buffers).
    buffer_budget = min(vmem_cap // 2, 48 * 1024 * 1024)
    row_bytes = _LANES * dtype_size
    max_tile_bytes = max(buffer_budget // 4, sublane_mult * row_bytes)
    tile_bytes_target = max(min(target_tile_bytes, max_tile_bytes),
                            sublane_mult * row_bytes)
    block_rows = max(sublane_mult,
                     (tile_bytes_target // row_bytes) // sublane_mult * sublane_mult)

    if rows <= block_rows:
        # Single full-extent block (any row count allowed when block == dim).
        tile_rows = rows
    else:
        tile_rows = block_rows  # sublane-aligned tile; ragged last block is masked

    # Only split work when there are multiple TensorCores (v7x).  On 1-TC
    # chips the grid is a serial loop, so splitting is pure overhead.
    if num_cores >= 2:
        desired_blocks = 4 * num_cores
        if (pl.cdiv(rows, tile_rows) < desired_blocks
                and rows >= desired_blocks * sublane_mult):
            tile_rows = max(sublane_mult,
                            _round_up(pl.cdiv(rows, desired_blocks), sublane_mult))

    grid = (pl.cdiv(rows, tile_rows),)

    # --- VMEM limit ------------------------------------------------------------
    tile_bytes = tile_rows * row_bytes
    vmem_limit = int(min(vmem_cap, max(32 * 1024 * 1024, 6 * tile_bytes)))

    out2d = pl.pallas_call(
        _hswish_kernel,
        out_shape=jax.ShapeDtypeStruct((rows, _LANES), orig_dtype),
        grid_spec=pltpu.PrefetchScalarGridSpec(
            num_scalar_prefetch=0,
            grid=grid,
            in_specs=[pl.BlockSpec((tile_rows, _LANES), lambda i: (i, 0))],
            out_specs=pl.BlockSpec((tile_rows, _LANES), lambda i: (i, 0)),
        ),
        compiler_params=pltpu.CompilerParams(
            dimension_semantics=("parallel",),
            vmem_limit_bytes=vmem_limit,
        ),
    )(x2d)

    out_prefix = out2d.reshape(-1)
    if tail:
        out_tail = _hswish_jnp(x_flat[rows * _LANES:])
        out_flat = jnp.concatenate([out_prefix, out_tail])
        return out_flat.reshape(orig_shape)
    return out_prefix.reshape(orig_shape)


if __name__ == "__main__":
    root = jax.random.PRNGKey(0)
    k0, k1, k2, k3 = jax.random.split(root, 4)

    def _ref(x):
        xf = x.astype(jnp.float32)
        return (xf * jnp.clip(xf + 3.0, 0.0, 6.0) / 6.0).astype(x.dtype)

    # 1) NCHW f32, 128-aligned size (the common conv-activation case).
    x = jax.random.normal(k0, (2, 4, 16, 16), dtype=jnp.float32) * 4.0
    y = hswish(x)
    jax.block_until_ready(y)
    assert y.shape == x.shape and y.dtype == x.dtype
    assert jnp.allclose(y, _ref(x), atol=1e-6, rtol=1e-6)

    # 2) Ragged size (not a multiple of 128): prefix kernel + jnp tail path.
    x2 = jax.random.normal(k1, (3, 5, 7, 9), dtype=jnp.float32) * 4.0
    y2 = hswish(x2)
    jax.block_until_ready(y2)
    assert y2.shape == x2.shape and y2.dtype == x2.dtype
    assert jnp.allclose(y2, _ref(x2), atol=1e-6, rtol=1e-6)

    # 3) Multi-block grid with a ragged last block (small target tile to force it).
    x3 = jax.random.normal(k2, (4, 8, 30, 32), dtype=jnp.float32) * 4.0
    y3 = hswish(x3, target_tile_bytes=32 * 1024)
    jax.block_until_ready(y3)
    assert y3.shape == x3.shape and y3.dtype == x3.dtype
    assert jnp.allclose(y3, _ref(x3), atol=1e-6, rtol=1e-6)

    # 4) bf16 activations (16-row sublane packing path).
    x4 = (jax.random.normal(k3, (2, 4, 16, 16), dtype=jnp.float32) * 4.0).astype(jnp.bfloat16)
    y4 = hswish(x4)
    jax.block_until_ready(y4)
    assert y4.shape == x4.shape and y4.dtype == x4.dtype
    assert jnp.allclose(y4.astype(jnp.float32), _ref(x4).astype(jnp.float32),
                        atol=2e-2, rtol=2e-2)

    print("KERNEL_OK")
</pallas_src>

<mosaic_0001>
module attributes {stable_mosaic.version = 11 : i64} {
  func.func @_hswish_kernel(%arg0: i32, %arg1: memref<16x128xf32, #tpu.memory_space<vmem>>, %arg2: memref<16x128xf32, #tpu.memory_space<vmem>>) attributes {dimension_semantics = [#tpu.dimension_semantics<parallel>], iteration_bounds = array<i64: 1>, scalar_prefetch = 0 : i64, scratch_operands = 0 : i64, tpu.core_type = #tpu.core_type<tc>, window_params = [{transform_indices = @transform_0, window_bounds = array<i64: 16, 128>}, {transform_indices = @transform_1, window_bounds = array<i64: 16, 128>}]} {
    %c0 = arith.constant 0 : index
    %c0_0 = arith.constant 0 : index
    %0 = vector.load %arg1[%c0, %c0_0] : memref<16x128xf32, #tpu.memory_space<vmem>>, vector<16x128xf32>
    %cst = arith.constant 3.000000e+00 : f32
    %1 = vector.broadcast %cst : f32 to vector<16x128xf32>
    %2 = arith.addf %0, %1 : vector<16x128xf32>
    %cst_1 = arith.constant 0.000000e+00 : f32
    %3 = vector.broadcast %cst_1 : f32 to vector<16x128xf32>
    %4 = arith.maximumf %2, %3 : vector<16x128xf32>
    %cst_2 = arith.constant 6.000000e+00 : f32
    %5 = vector.broadcast %cst_2 : f32 to vector<16x128xf32>
    %6 = arith.minimumf %4, %5 : vector<16x128xf32>
    %7 = arith.mulf %0, %6 : vector<16x128xf32>
    %cst_3 = arith.constant 6.000000e+00 : f32
    %8 = vector.broadcast %cst_3 : f32 to vector<16x128xf32>
    %9 = arith.divf %7, %8 : vector<16x128xf32>
    %c0_4 = arith.constant 0 : index
    %c0_5 = arith.constant 0 : index
    %10 = vector.load %arg2[%c0_4, %c0_5] : memref<16x128xf32, #tpu.memory_space<vmem>>, vector<16x128xf32>
    tpu.vector_store %arg2[%c0_4, %c0_5], %9 {strides = array<i32>} : memref<16x128xf32, #tpu.memory_space<vmem>>, vector<16x128xf32>,
    return
  }
  func.func @transform_0(%arg0: i32) -> (i32, i32) {
    %c0_i32 = arith.constant 0 : i32
    %c0_i32_0 = arith.constant 0 : i32
    return %arg0, %c0_i32 : i32, i32
  }
  func.func @transform_1(%arg0: i32) -> (i32, i32) {
    %c0_i32 = arith.constant 0 : i32
    %c0_i32_0 = arith.constant 0 : i32
    return %arg0, %c0_i32 : i32, i32
  }
}

</mosaic_0001>

<llo_original>
// kernel: tpu_custom_call.1
$region0: #{tpu_custom_call.1}
  #allocation0 [shape = 'u32[]', space=smem, size = 0x4, offset = 0x4, fixed_abs, tag = 'smem constant byte address 0x4 - core index']
  #allocation1 [shape = 'u32[144,128]{1,0:T(1,128)}', space=vmem, size = 0x12000, scoped, tag = 'internal scratch']
  %s0 = inlined_call_operand.hbm [shape: f32[16,128], index: 0, kind: input, shape index: {}]
  %s1 = inlined_call_operand.hbm [shape: f32[16,128], index: 1, kind: output, shape index: {}]
  %s2 = sld [smem:[#allocation0]]
  $region18: #{tpu_custom_call.1} parent=0
    _
  %s4 = ssub.s32 1, %s2
  %s5 = scalar_select 0, %s4, %s2
  $region1: #{tpu_custom_call.1} parent=0
    #allocation2 [shape = 'u8[8192]{0}', space=vmem, size = 0x2000, scoped, tag = 'input window, operand 0, single buffered']
    #allocation3 [shape = 's32[1]{0}', space=sflag, size = 0x4, scoped, tag = 'scoped memory for tpu_custom_call.1']
    #allocation4 [shape = 's32[1]{0}', space=sflag, size = 0x4, scoped, tag = 'scoped memory for tpu_custom_call.1']
    #allocation5 [shape = 'u8[8192]{0}', space=vmem, size = 0x2000, scoped, tag = 'output window, operand 0, single buffered']
    %6 = vsyncpa [#allocation3], 0
    %7 = vsyncpa [#allocation4], 0
    // Predicated region
    $region2: #{tpu_custom_call.1} parent=1 // pred_check
      _
    $region3: #{tpu_custom_call.1} parent=1 // pred_check_branch
      %9 = sbr.rel (0) target = $region5
    $region4: #{tpu_custom_call.1} parent=1 // pred_region
      %s11 = ssub.s32 256, 256
      %12 = vsyncadd [#allocation3], %s11
      %s13 = sshll.u32 [#allocation2], 4
      %s14 = int_to_ptr.vmem [resolvable:$true] %s13
      %19 = dma.hbm_to_vmem [thread:$0]  %s0, 256, %s14, [#allocation3], 128, 128, 8
    $region5: #{tpu_custom_call.1} parent=1 // pred_fallthru
      _
    // Predicated region
    $region6: #{tpu_custom_call.1} parent=1 // pred_check
      _
    $region7: #{tpu_custom_call.1} parent=1 // pred_check_branch
      %21 = sbr.rel (0) target = $region9
    $region8: #{tpu_custom_call.1} parent=1 // pred_region
      %22 = dma.done [#allocation3], 256
    $region9: #{tpu_custom_call.1} parent=1 // pred_fallthru
      _
    %v23 = vld [vmem:[#allocation2] sm:$0xff]
    %v24 = vld [vmem:[#allocation2 + $0x8] sm:$0xff]
    %v25 = vadd.f32 %v23, 3.0
    %v26 = vadd.f32 %v24, 3.0
    %v27 = vmax.f32 %v25, 0.0
    %v28 = vmax.f32 %v26, 0.0
    %v29 = vmin.f32 %v27, 6.0
    %v30 = vmin.f32 %v28, 6.0
    %v31 = vmul.f32 %v23, %v29
    %v32 = vmul.f32 %v24, %v30
    %v33 = vrcp.pop 6.0
    %v34 = vmul.f32 %v31, %v33
    %v35 = vmul.f32 %v32, %v33
    %36 = vst [vmem:[#allocation5] sm:$0xff] %v34
    %37 = vst [vmem:[#allocation5 + $0x8] sm:$0xff] %v35
    // Predicated region
    $region10: #{tpu_custom_call.1} parent=1 // pred_check
      _
    $region11: #{tpu_custom_call.1} parent=1 // pred_check_branch
      %39 = sbr.rel (0) target = $region13
    $region12: #{tpu_custom_call.1} parent=1 // pred_region
      %s41 = ssub.s32 256, 256
      %42 = vsyncadd [#allocation4], %s41
      %s43 = sshll.u32 [#allocation5], 4
      %s44 = int_to_ptr.vmem [resolvable:$true] %s43
      %49 = dma.vmem_to_hbm [thread:$0]  %s44, 256, %s1, [#allocation4], 128, 128, 8
    $region13: #{tpu_custom_call.1} parent=1 // pred_fallthru
      _
    // Predicated region
    $region14: #{tpu_custom_call.1} parent=1 // pred_check
      _
    $region15: #{tpu_custom_call.1} parent=1 // pred_check_branch
      %51 = sbr.rel (0) target = $region17
    $region16: #{tpu_custom_call.1} parent=1 // pred_region
      %52 = dma.done [#allocation4], 256
    $region17: #{tpu_custom_call.1} parent=1 // pred_fallthru
      _
    %53 = vsyncpa [#allocation3], 1
    %54 = vsyncpa [#allocation4], 1

</llo_original>
